<compile_context>
chip_gen: v7x
topology: tpu7x:2x2x1
jax: 0.10.0
libtpu: 0.0.40
codegen_flags: <defaults>
</compile_context>

<pallas_src>
import jax
import jax.numpy as jnp
from jax.experimental import pallas as pl
from jax.experimental.pallas import tpu as pltpu


def _round_up(x, m):
    return ((x + m - 1) // m) * m


def _update_v_kernel(lo_ref, hi_ref,                       # scalar prefetch (SMEM)
                     idx_ref, e2_ref,                      # per-edge-block inputs
                     wup_ref, bup_ref, wl_ref, bl_ref, wout_ref,  # resident params
                     out_ref,                              # (tn, C_pad) output tile
                     acc_ref):                             # (tn, H) f32 scratch
    i = pl.program_id(0)            # node tile
    k = pl.program_id(1)            # edge block (reduction axis, last)
    nk = pl.num_programs(1)
    tn = acc_ref.shape[0]
    te = e2_ref.shape[0]
    num_layers = wl_ref.shape[0]

    @pl.when(k == 0)
    def _init():
        acc_ref[...] = jnp.zeros_like(acc_ref)

    # Only edge blocks that can contain edges destined to this node tile contribute
    # (edges are sorted by destination node; out-of-range steps re-reference a clamped
    #  block -> no new DMA -> and skip all compute).
    @pl.when((k >= lo_ref[i]) & (k <= hi_ref[i]))
    def _accumulate():
        # local scatter_add(e2, i, dim=0): one-hot (tn, te) matmul on the MXU,
        # accumulated exactly in f32. Edges belonging to other tiles / padding
        # simply never match and contribute zero.
        rows = i * tn + jax.lax.broadcasted_iota(jnp.int32, (tn, te), 0)
        onehot = (rows == idx_ref[...]).astype(e2_ref.dtype)
        acc_ref[...] += jnp.dot(onehot, e2_ref[...],
                                preferred_element_type=jnp.float32)

    @pl.when(k == nk - 1)
    def _finalize():
        w_dtype = wup_ref.dtype
        v = acc_ref[...]                                    # (tn, H) f32
        # lin_up: hidden -> out_emb (+ bias)
        v = jnp.dot(v.astype(w_dtype), wup_ref[...],
                    preferred_element_type=jnp.float32)
        v = v + bup_ref[...].astype(jnp.float32)
        # hidden output layers with swish/SiLU (elementwise kept in f32)
        for l in range(num_layers):                         # static unroll
            v = jnp.dot(v.astype(w_dtype), wl_ref[l],
                        preferred_element_type=jnp.float32)
            v = v + bl_ref[l].astype(jnp.float32)
            v = v * jax.nn.sigmoid(v)
        # final projection: out_emb -> out_channels (no bias), lane-dense padded store
        out_ref[...] = jnp.dot(v.astype(w_dtype), wout_ref[...],
                               preferred_element_type=jnp.float32).astype(out_ref.dtype)


def update_v_pallas(i_idx, e2, w_up, b_up, w_lins, b_lins, w_out, num_nodes,
                    *, tn=256, te=2048):
    """i_idx: (E,) int, e2: (E, H), w_up: (H, D), b_up: (1, D),
    w_lins: (L, D, D), b_lins: (L, 1, D), w_out: (D, C) -> (num_nodes, C).
    Weights are pre-transposed to (in, out), i.e. the kernel computes x @ W."""
    E, H = e2.shape
    D = w_up.shape[1]
    L = w_lins.shape[0]
    C = w_out.shape[1]

    # ---- tile sizes (node rows x edge cols), respecting (8, 128) tiling ----
    tn = min(tn, _round_up(max(num_nodes, 8), 8))
    te = min(te, _round_up(max(E, 128), 128))
    N_pad = _round_up(num_nodes, tn)
    E_pad = _round_up(E, te)
    C_pad = _round_up(C, 128)                 # lane-dense output stores
    n_node_tiles = N_pad // tn
    n_edge_blocks = E_pad // te

    # ---- sort edges by destination node so each node tile owns a contiguous
    #      edge range; pad edges with a sentinel that never matches a row ----
    i_idx = i_idx.astype(jnp.int32)
    order = jnp.argsort(i_idx)
    idx_s = i_idx[order]
    e2_s = e2[order]
    pad_e = E_pad - E
    if pad_e:
        idx_s = jnp.concatenate([idx_s, jnp.full((pad_e,), N_pad, dtype=jnp.int32)])
        e2_s = jnp.concatenate([e2_s, jnp.zeros((pad_e, H), e2.dtype)])

    # per node tile: first/last edge block that may contain its edges (SMEM prefetch)
    tile_lo = jnp.arange(n_node_tiles, dtype=jnp.int32) * tn
    start_e = jnp.searchsorted(idx_s, tile_lo, side="left")
    end_e = jnp.searchsorted(idx_s, tile_lo + tn, side="left")
    block_lo = (start_e // te).astype(jnp.int32)
    block_hi = jnp.where(end_e > start_e, (end_e - 1) // te, -1).astype(jnp.int32)

    idx2d = idx_s.reshape(1, E_pad)
    w_out_p = jnp.pad(w_out, ((0, 0), (0, C_pad - C)))

    def _clamp(k, lo, hi, i):
        # keep out-of-range steps pointing at an already-fetched block (no extra DMA)
        return jnp.minimum(jnp.maximum(k, lo[i]), jnp.maximum(hi[i], lo[i]))

    idx_spec = pl.BlockSpec((1, te), lambda i, k, lo, hi: (0, _clamp(k, lo, hi, i)))
    e2_spec = pl.BlockSpec((te, H), lambda i, k, lo, hi: (_clamp(k, lo, hi, i), 0))
    wup_spec = pl.BlockSpec((H, D), lambda i, k, lo, hi: (0, 0))
    bup_spec = pl.BlockSpec((1, D), lambda i, k, lo, hi: (0, 0))
    wl_spec = pl.BlockSpec((L, D, D), lambda i, k, lo, hi: (0, 0, 0))
    bl_spec = pl.BlockSpec((L, 1, D), lambda i, k, lo, hi: (0, 0, 0))
    wout_spec = pl.BlockSpec((D, C_pad), lambda i, k, lo, hi: (0, 0))
    out_spec = pl.BlockSpec((tn, C_pad), lambda i, k, lo, hi: (i, 0))

    grid_spec = pltpu.PrefetchScalarGridSpec(
        num_scalar_prefetch=2,
        grid=(n_node_tiles, n_edge_blocks),
        in_specs=[idx_spec, e2_spec, wup_spec, bup_spec, wl_spec, bl_spec, wout_spec],
        out_specs=out_spec,
        scratch_shapes=[pltpu.VMEM((tn, H), jnp.float32)],
    )

    e_isz = jnp.dtype(e2.dtype).itemsize
    w_isz = jnp.dtype(w_up.dtype).itemsize
    block_bytes = 2 * (te * H * e_isz + te * 4 + tn * C_pad * 4) + tn * H * 4
    weight_bytes = (H * D + D + L * D * D + L * D + D * C_pad) * w_isz
    vmem_limit = int(min(max(4 * (block_bytes + weight_bytes), 16 << 20), 48 << 20))

    cost = pl.CostEstimate(
        flops=int(2 * E_pad * tn * H + 2 * N_pad * (H * D + L * D * D + D * C_pad)),
        transcendentals=int(N_pad * L * D),
        bytes_accessed=int(E_pad * (H * e_isz + 4) + weight_bytes + N_pad * C_pad * 4),
    )

    out_padded = pl.pallas_call(
        _update_v_kernel,
        out_shape=jax.ShapeDtypeStruct((N_pad, C_pad), jnp.float32),
        grid_spec=grid_spec,
        compiler_params=pltpu.CompilerParams(
            dimension_semantics=("parallel", "arbitrary"),
            vmem_limit_bytes=vmem_limit,
        ),
        cost_estimate=cost,
    )(block_lo, block_hi, idx2d, e2_s, w_up, b_up, w_lins, b_lins, w_out_p)

    return out_padded[:num_nodes, :C]


def _glorot(key, shape):
    # Deterministic stand-in for glorot_orthogonal (scale=2.0): glorot-normal init.
    fan_in, fan_out = shape[-2], shape[-1]
    std = (2.0 / (fan_in + fan_out)) ** 0.5
    return std * jax.random.normal(key, shape, dtype=jnp.float32)


def _reference(i_idx, e2, w_up, b_up, w_lins, b_lins, w_out, num_nodes):
    v = jax.ops.segment_sum(e2, i_idx, num_segments=num_nodes)
    v = v @ w_up + b_up
    for l in range(w_lins.shape[0]):
        v = v @ w_lins[l] + b_lins[l]
        v = jax.nn.silu(v)
    return v @ w_out


if __name__ == "__main__":
    # Small shapes consistent with the module's forward (multi-tile to exercise the grid).
    num_edges = 300
    num_nodes = 40
    hidden_channels = 32
    out_emb_channels = 32
    out_channels = 16
    num_output_layers = 2

    key = jax.random.PRNGKey(0)
    k_e2, k_i, k_up, k_bu, k_l, k_bl, k_out = jax.random.split(key, 7)

    e2 = jax.random.normal(k_e2, (num_edges, hidden_channels), dtype=jnp.float32)
    i_idx = jax.random.randint(k_i, (num_edges,), 0, num_nodes, dtype=jnp.int32)

    # Parameters (weights stored transposed: (in, out)); output_init='GlorotOrthogonal'.
    w_up = _glorot(k_up, (hidden_channels, out_emb_channels))
    b_up = 0.1 * jax.random.normal(k_bu, (1, out_emb_channels), dtype=jnp.float32)
    w_lins = _glorot(k_l, (num_output_layers, out_emb_channels, out_emb_channels))
    b_lins = 0.1 * jax.random.normal(k_bl, (num_output_layers, 1, out_emb_channels),
                                     dtype=jnp.float32)
    w_out = _glorot(k_out, (out_emb_channels, out_channels))

    out = update_v_pallas(i_idx, e2, w_up, b_up, w_lins, b_lins, w_out, num_nodes,
                          tn=16, te=128)
    out = jax.block_until_ready(out)

    ref = _reference(i_idx, e2, w_up, b_up, w_lins, b_lins, w_out, num_nodes)
    assert out.shape == (num_nodes, out_channels)
    assert jnp.allclose(out, ref, atol=1e-4, rtol=1e-4), float(jnp.max(jnp.abs(out - ref)))
    print("KERNEL_OK")
</pallas_src>

<mosaic_0001>
module attributes {stable_mosaic.version = 11 : i64} {
  func.func @_update_v_kernel(%arg0: i32, %arg1: i32, %arg2: memref<3xi32, #tpu.memory_space<smem>>, %arg3: memref<3xi32, #tpu.memory_space<smem>>, %arg4: memref<1x128xi32, #tpu.memory_space<vmem>>, %arg5: memref<128x32xf32, #tpu.memory_space<vmem>>, %arg6: memref<32x32xf32, #tpu.memory_space<vmem>>, %arg7: memref<1x32xf32, #tpu.memory_space<vmem>>, %arg8: memref<2x32x32xf32, #tpu.memory_space<vmem>>, %arg9: memref<2x1x32xf32, #tpu.memory_space<vmem>>, %arg10: memref<32x128xf32, #tpu.memory_space<vmem>>, %arg11: memref<16x128xf32, #tpu.memory_space<vmem>>, %arg12: memref<16x32xf32, #tpu.memory_space<vmem>>) attributes {dimension_semantics = [#tpu.dimension_semantics<parallel>, #tpu.dimension_semantics<arbitrary>], iteration_bounds = array<i64: 3, 3>, scalar_prefetch = 2 : i64, scratch_operands = 1 : i64, tpu.core_type = #tpu.core_type<tc>, window_params = [{transform_indices = @transform_0, window_bounds = array<i64: 1, 128>}, {transform_indices = @transform_1, window_bounds = array<i64: 128, 32>}, {pipeline_mode = #tpu.pipeline_mode<synchronous>, transform_indices = @transform_2, window_bounds = array<i64: 32, 32>}, {pipeline_mode = #tpu.pipeline_mode<synchronous>, transform_indices = @transform_3, window_bounds = array<i64: 1, 32>}, {pipeline_mode = #tpu.pipeline_mode<synchronous>, transform_indices = @transform_4, window_bounds = array<i64: 2, 32, 32>}, {pipeline_mode = #tpu.pipeline_mode<synchronous>, transform_indices = @transform_5, window_bounds = array<i64: 2, 1, 32>}, {pipeline_mode = #tpu.pipeline_mode<synchronous>, transform_indices = @transform_6, window_bounds = array<i64: 32, 128>}, {transform_indices = @transform_7, window_bounds = array<i64: 16, 128>}]} {
    %c0_i32 = arith.constant 0 : i32
    %0 = arith.cmpi eq, %arg1, %c0_i32 : i32
    %1 = arith.extui %0 : i1 to i32
    %c0_i32_0 = arith.constant 0 : i32
    %2 = arith.cmpi ne, %1, %c0_i32_0 : i32
    scf.if %2 {
      %cst = arith.constant 0.000000e+00 : f32
      %15 = vector.broadcast %cst : f32 to vector<16x32xf32>
      %c0 = arith.constant 0 : index
      %c0_3 = arith.constant 0 : index
      %16 = vector.load %arg12[%c0, %c0_3] : memref<16x32xf32, #tpu.memory_space<vmem>>, vector<16x32xf32>
      tpu.vector_store %arg12[%c0, %c0_3], %15 {strides = array<i32>} : memref<16x32xf32, #tpu.memory_space<vmem>>, vector<16x32xf32>,
    } else {
    }
    %3 = arith.index_cast %arg0 : i32 to index
    %4 = memref.load %arg2[%3] : memref<3xi32, #tpu.memory_space<smem>>
    %5 = arith.cmpi sge, %arg1, %4 : i32
    %6 = arith.index_cast %arg0 : i32 to index
    %7 = memref.load %arg3[%6] : memref<3xi32, #tpu.memory_space<smem>>
    %8 = arith.cmpi sle, %arg1, %7 : i32
    %9 = arith.andi %5, %8 : i1
    %10 = arith.extui %9 : i1 to i32
    %c0_i32_1 = arith.constant 0 : i32
    %11 = arith.cmpi ne, %10, %c0_i32_1 : i32
    scf.if %11 {
      %c16_i32 = arith.constant 16 : i32
      %15 = arith.muli %arg0, %c16_i32 : i32
      %16 = tpu.iota {dimensions = array<i32: 0>} : vector<16x128xi32>
      %17 = vector.broadcast %15 : i32 to vector<16x128xi32>
      %18 = arith.addi %17, %16 : vector<16x128xi32>
      %c0 = arith.constant 0 : index
      %c0_3 = arith.constant 0 : index
      %19 = vector.load %arg4[%c0, %c0_3] : memref<1x128xi32, #tpu.memory_space<vmem>>, vector<1x128xi32>
      %20 = vector.broadcast %19 : vector<1x128xi32> to vector<16x128xi32>
      %21 = arith.cmpi eq, %18, %20 : vector<16x128xi32>
      %22 = arith.extui %21 : vector<16x128xi1> to vector<16x128xi32>
      %23 = arith.sitofp %22 : vector<16x128xi32> to vector<16x128xf32>
      %c0_4 = arith.constant 0 : index
      %c0_5 = arith.constant 0 : index
      %24 = vector.load %arg12[%c0_4, %c0_5] : memref<16x32xf32, #tpu.memory_space<vmem>>, vector<16x32xf32>
      %c0_6 = arith.constant 0 : index
      %c0_7 = arith.constant 0 : index
      %25 = vector.load %arg5[%c0_6, %c0_7] : memref<128x32xf32, #tpu.memory_space<vmem>>, vector<128x32xf32>
      %cst = arith.constant dense<0.000000e+00> : vector<16x32xf32>
      %26 = tpu.matmul %23, %25, %cst {dimension_numbers = #tpu.dot_dimension_numbers<[1], [0], [0], [1], [0, 0, 1, 1], [], []>} : vector<16x128xf32>, vector<128x32xf32>, vector<16x32xf32> -> vector<16x32xf32>
      %27 = arith.addf %24, %26 : vector<16x32xf32>
      %c0_8 = arith.constant 0 : index
      %c0_9 = arith.constant 0 : index
      %28 = vector.load %arg12[%c0_8, %c0_9] : memref<16x32xf32, #tpu.memory_space<vmem>>, vector<16x32xf32>
      tpu.vector_store %arg12[%c0_8, %c0_9], %27 {strides = array<i32>} : memref<16x32xf32, #tpu.memory_space<vmem>>, vector<16x32xf32>,
    } else {
    }
    %c2_i32 = arith.constant 2 : i32
    %12 = arith.cmpi eq, %arg1, %c2_i32 : i32
    %13 = arith.extui %12 : i1 to i32
    %c0_i32_2 = arith.constant 0 : i32
    %14 = arith.cmpi ne, %13, %c0_i32_2 : i32
    scf.if %14 {
      %c0 = arith.constant 0 : index
      %c0_3 = arith.constant 0 : index
      %15 = vector.load %arg12[%c0, %c0_3] : memref<16x32xf32, #tpu.memory_space<vmem>>, vector<16x32xf32>
      %c0_4 = arith.constant 0 : index
      %c0_5 = arith.constant 0 : index
      %16 = vector.load %arg6[%c0_4, %c0_5] : memref<32x32xf32, #tpu.memory_space<vmem>>, vector<32x32xf32>
      %cst = arith.constant dense<0.000000e+00> : vector<16x32xf32>
      %17 = tpu.matmul %15, %16, %cst {dimension_numbers = #tpu.dot_dimension_numbers<[1], [0], [0], [1], [0, 0, 1, 1], [], []>} : vector<16x32xf32>, vector<32x32xf32>, vector<16x32xf32> -> vector<16x32xf32>
      %c0_6 = arith.constant 0 : index
      %c0_7 = arith.constant 0 : index
      %18 = vector.load %arg7[%c0_6, %c0_7] : memref<1x32xf32, #tpu.memory_space<vmem>>, vector<1x32xf32>
      %19 = vector.broadcast %18 : vector<1x32xf32> to vector<16x32xf32>
      %20 = arith.addf %17, %19 : vector<16x32xf32>
      %c0_8 = arith.constant 0 : index
      %c0_9 = arith.constant 0 : index
      %c0_10 = arith.constant 0 : index
      %21 = vector.load %arg8[%c0_8, %c0_9, %c0_10] : memref<2x32x32xf32, #tpu.memory_space<vmem>>, vector<1x32x32xf32>
      %22 = vector.shape_cast %21 : vector<1x32x32xf32> to vector<32x32xf32>
      %cst_11 = arith.constant dense<0.000000e+00> : vector<16x32xf32>
      %23 = tpu.matmul %20, %22, %cst_11 {dimension_numbers = #tpu.dot_dimension_numbers<[1], [0], [0], [1], [0, 0, 1, 1], [], []>} : vector<16x32xf32>, vector<32x32xf32>, vector<16x32xf32> -> vector<16x32xf32>
      %c0_12 = arith.constant 0 : index
      %c0_13 = arith.constant 0 : index
      %c0_14 = arith.constant 0 : index
      %24 = vector.load %arg9[%c0_12, %c0_13, %c0_14] : memref<2x1x32xf32, #tpu.memory_space<vmem>>, vector<1x1x32xf32>
      %25 = vector.shape_cast %24 : vector<1x1x32xf32> to vector<1x32xf32>
      %26 = vector.broadcast %25 : vector<1x32xf32> to vector<16x32xf32>
      %27 = arith.addf %23, %26 : vector<16x32xf32>
      %28 = arith.negf %27 : vector<16x32xf32>
      %29 = math.exp %28 : vector<16x32xf32>
      %cst_15 = arith.constant 1.000000e+00 : f32
      %30 = vector.broadcast %cst_15 : f32 to vector<16x32xf32>
      %31 = arith.addf %30, %29 : vector<16x32xf32>
      %32 = arith.divf %30, %31 : vector<16x32xf32>
      %33 = arith.mulf %27, %32 : vector<16x32xf32>
      %c1 = arith.constant 1 : index
      %c0_16 = arith.constant 0 : index
      %c0_17 = arith.constant 0 : index
      %34 = vector.load %arg8[%c1, %c0_16, %c0_17] : memref<2x32x32xf32, #tpu.memory_space<vmem>>, vector<1x32x32xf32>
      %35 = vector.shape_cast %34 : vector<1x32x32xf32> to vector<32x32xf32>
      %cst_18 = arith.constant dense<0.000000e+00> : vector<16x32xf32>
      %36 = tpu.matmul %33, %35, %cst_18 {dimension_numbers = #tpu.dot_dimension_numbers<[1], [0], [0], [1], [0, 0, 1, 1], [], []>} : vector<16x32xf32>, vector<32x32xf32>, vector<16x32xf32> -> vector<16x32xf32>
      %c1_19 = arith.constant 1 : index
      %c0_20 = arith.constant 0 : index
      %c0_21 = arith.constant 0 : index
      %37 = vector.load %arg9[%c1_19, %c0_20, %c0_21] : memref<2x1x32xf32, #tpu.memory_space<vmem>>, vector<1x1x32xf32>
      %38 = vector.shape_cast %37 : vector<1x1x32xf32> to vector<1x32xf32>
      %39 = vector.broadcast %38 : vector<1x32xf32> to vector<16x32xf32>
      %40 = arith.addf %36, %39 : vector<16x32xf32>
      %41 = arith.negf %40 : vector<16x32xf32>
      %42 = math.exp %41 : vector<16x32xf32>
      %cst_22 = arith.constant 1.000000e+00 : f32
      %43 = vector.broadcast %cst_22 : f32 to vector<16x32xf32>
      %44 = arith.addf %43, %42 : vector<16x32xf32>
      %45 = arith.divf %43, %44 : vector<16x32xf32>
      %46 = arith.mulf %40, %45 : vector<16x32xf32>
      %c0_23 = arith.constant 0 : index
      %c0_24 = arith.constant 0 : index
      %47 = vector.load %arg10[%c0_23, %c0_24] : memref<32x128xf32, #tpu.memory_space<vmem>>, vector<32x128xf32>
      %cst_25 = arith.constant dense<0.000000e+00> : vector<16x128xf32>
      %48 = tpu.matmul %46, %47, %cst_25 {dimension_numbers = #tpu.dot_dimension_numbers<[1], [0], [0], [1], [0, 0, 1, 1], [], []>} : vector<16x32xf32>, vector<32x128xf32>, vector<16x128xf32> -> vector<16x128xf32>
      %c0_26 = arith.constant 0 : index
      %c0_27 = arith.constant 0 : index
      %49 = vector.load %arg11[%c0_26, %c0_27] : memref<16x128xf32, #tpu.memory_space<vmem>>, vector<16x128xf32>
      tpu.vector_store %arg11[%c0_26, %c0_27], %48 {strides = array<i32>} : memref<16x128xf32, #tpu.memory_space<vmem>>, vector<16x128xf32>,
    } else {
    }
    return
  }
  func.func @transform_0(%arg0: i32, %arg1: i32, %arg2: memref<3xi32, #tpu.memory_space<smem>>, %arg3: memref<3xi32, #tpu.memory_space<smem>>) -> (i32, i32) {
    %0 = arith.index_cast %arg0 : i32 to index
    %1 = memref.load %arg2[%0] : memref<3xi32, #tpu.memory_space<smem>>
    %2 = arith.maxsi %arg1, %1 : i32
    %3 = arith.index_cast %arg0 : i32 to index
    %4 = memref.load %arg3[%3] : memref<3xi32, #tpu.memory_space<smem>>
    %5 = arith.index_cast %arg0 : i32 to index
    %6 = memref.load %arg2[%5] : memref<3xi32, #tpu.memory_space<smem>>
    %7 = arith.maxsi %4, %6 : i32
    %8 = arith.minsi %2, %7 : i32
    %c0_i32 = arith.constant 0 : i32
    %c0_i32_0 = arith.constant 0 : i32
    return %c0_i32, %8 : i32, i32
  }
  func.func @transform_1(%arg0: i32, %arg1: i32, %arg2: memref<3xi32, #tpu.memory_space<smem>>, %arg3: memref<3xi32, #tpu.memory_space<smem>>) -> (i32, i32) {
    %0 = arith.index_cast %arg0 : i32 to index
    %1 = memref.load %arg2[%0] : memref<3xi32, #tpu.memory_space<smem>>
    %2 = arith.maxsi %arg1, %1 : i32
    %3 = arith.index_cast %arg0 : i32 to index
    %4 = memref.load %arg3[%3] : memref<3xi32, #tpu.memory_space<smem>>
    %5 = arith.index_cast %arg0 : i32 to index
    %6 = memref.load %arg2[%5] : memref<3xi32, #tpu.memory_space<smem>>
    %7 = arith.maxsi %4, %6 : i32
    %8 = arith.minsi %2, %7 : i32
    %c0_i32 = arith.constant 0 : i32
    %c0_i32_0 = arith.constant 0 : i32
    return %8, %c0_i32 : i32, i32
  }
  func.func @transform_2(%arg0: i32, %arg1: i32, %arg2: memref<3xi32, #tpu.memory_space<smem>>, %arg3: memref<3xi32, #tpu.memory_space<smem>>) -> (i32, i32) {
    %c0_i32 = arith.constant 0 : i32
    %c0_i32_0 = arith.constant 0 : i32
    %c0_i32_1 = arith.constant 0 : i32
    return %c0_i32, %c0_i32_0 : i32, i32
  }
  func.func @transform_3(%arg0: i32, %arg1: i32, %arg2: memref<3xi32, #tpu.memory_space<smem>>, %arg3: memref<3xi32, #tpu.memory_space<smem>>) -> (i32, i32) {
    %c0_i32 = arith.constant 0 : i32
    %c0_i32_0 = arith.constant 0 : i32
    %c0_i32_1 = arith.constant 0 : i32
    return %c0_i32, %c0_i32_0 : i32, i32
  }
  func.func @transform_4(%arg0: i32, %arg1: i32, %arg2: memref<3xi32, #tpu.memory_space<smem>>, %arg3: memref<3xi32, #tpu.memory_space<smem>>) -> (i32, i32, i32) {
    %c0_i32 = arith.constant 0 : i32
    %c0_i32_0 = arith.constant 0 : i32
    %c0_i32_1 = arith.constant 0 : i32
    %c0_i32_2 = arith.constant 0 : i32
    return %c0_i32, %c0_i32_0, %c0_i32_1 : i32, i32, i32
  }
  func.func @transform_5(%arg0: i32, %arg1: i32, %arg2: memref<3xi32, #tpu.memory_space<smem>>, %arg3: memref<3xi32, #tpu.memory_space<smem>>) -> (i32, i32, i32) {
    %c0_i32 = arith.constant 0 : i32
    %c0_i32_0 = arith.constant 0 : i32
    %c0_i32_1 = arith.constant 0 : i32
    %c0_i32_2 = arith.constant 0 : i32
    return %c0_i32, %c0_i32_0, %c0_i32_1 : i32, i32, i32
  }
  func.func @transform_6(%arg0: i32, %arg1: i32, %arg2: memref<3xi32, #tpu.memory_space<smem>>, %arg3: memref<3xi32, #tpu.memory_space<smem>>) -> (i32, i32) {
    %c0_i32 = arith.constant 0 : i32
    %c0_i32_0 = arith.constant 0 : i32
    %c0_i32_1 = arith.constant 0 : i32
    return %c0_i32, %c0_i32_0 : i32, i32
  }
  func.func @transform_7(%arg0: i32, %arg1: i32, %arg2: memref<3xi32, #tpu.memory_space<smem>>, %arg3: memref<3xi32, #tpu.memory_space<smem>>) -> (i32, i32) {
    %c0_i32 = arith.constant 0 : i32
    %c0_i32_0 = arith.constant 0 : i32
    return %arg0, %c0_i32 : i32, i32
  }
}

</mosaic_0001>

<llo_original>
// kernel: tpu_custom_call.1
$region0: #{tpu_custom_call.1}
  #allocation0 [shape = 'u32[]', space=smem, size = 0x4, offset = 0x4, fixed_abs, tag = 'smem constant byte address 0x4 - core index']
  #allocation1 [shape = 'u32[144,128]{1,0:T(1,128)}', space=vmem, size = 0x12000, scoped, tag = 'internal scratch']
  #allocation2 [shape = 'f32[16,32]{1,0:T(8,128)}', space=vmem, size = 0x2000, scoped, tag = 'scratch operand']
  #allocation3 [shape = 's32[1]{0}', space=sflag, size = 0x4, scoped, tag = 'scoped memory for tpu_custom_call.1']
  #allocation4 [shape = 'u8[512]{0}', space=smem, size = 0x200, scoped, tag = 'prefetched SMEM operand 0']
  #allocation5 [shape = 'u8[512]{0}', space=smem, size = 0x200, scoped, tag = 'prefetched SMEM operand 1']
  %s0 = inlined_call_operand.vmem [shape: s32[3], index: 0, kind: input, shape index: {}]
  %s1 = inlined_call_operand.vmem [shape: s32[3], index: 1, kind: input, shape index: {}]
  %s2 = inlined_call_operand.vmem [shape: s32[1,384], index: 2, kind: input, shape index: {}]
  %s3 = inlined_call_operand.vmem [shape: f32[384,32], index: 3, kind: input, shape index: {}]
  %s4 = inlined_call_operand.vmem [shape: f32[32,32], index: 4, kind: input, shape index: {}]
  %s5 = inlined_call_operand.vmem [shape: f32[1,32], index: 5, kind: input, shape index: {}]
  %s6 = inlined_call_operand.vmem [shape: f32[2,32,32], index: 6, kind: input, shape index: {}]
  %s7 = inlined_call_operand.vmem [shape: f32[2,1,32], index: 7, kind: input, shape index: {}]
  %s8 = inlined_call_operand.vmem [shape: f32[32,128], index: 8, kind: input, shape index: {}]
  %s9 = inlined_call_operand.hbm [shape: f32[48,128], index: 9, kind: output, shape index: {}]
  %s10 = sld [smem:[#allocation0]]
  $region73: #{tpu_custom_call.1} parent=0
    _
  %s12 = ssub.s32 1, %s10
  %s13 = scalar_select 0, %s12, %s10
  %s14 = sshll.u32 %s0, 4
  %s15 = int_to_ptr.vmem [resolvable:$true] %s14
  %17 = dma.vmem_to_smem %s15, 16, [#allocation4], [#allocation3]
  %s18 = sshll.u32 %s1, 4
  %s19 = int_to_ptr.vmem [resolvable:$true] %s18
  %21 = dma.vmem_to_smem %s19, 16, [#allocation5], [#allocation3]
  %22 = dma.done [#allocation3], 32
  %23 = sfence
  $region1: #{tpu_custom_call.1} parent=0
    #allocation6 [shape = 'u8[16384]{0}', space=vmem, size = 0x4000, scoped, tag = 'output window, operand 0']
    #allocation7 [shape = 's32[2]{0}', space=sflag, size = 0x8, scoped, tag = 'scoped memory for tpu_custom_call.1']
    %24 = vsyncpa [#allocation7], 0
    %s25 = scalar_lea.sflag [#allocation7], 1
    %26 = vsyncpa %s25, 0
    loop: start=0, step=1, limit=11
    $region2: #{tpu_custom_call.1} parent=1 // loop_pre_header
      _
    $region3: #{tpu_custom_call.1} parent=1 // loop_header
      %s28 = sphi 0, %s32
      %p29 = scmp.ge.s32.totalorder %s28, 11
      %s35 = sphi 0, %s47
      %s36 = sphi 0, %s43
      %s37 = sphi 0, %s35
      %s38 = sphi 0, %s36
      %s39 = sphi 0, %s37
      %s40 = sphi 0, %s38
      %s66 = sphi 0, %s68
      %s69 = sphi 0, %s66
      %s70 = sphi 0, %s69
      %s86 = sphi 0, %s70
      %s108 = sphi 0, %s110
      %s111 = sphi 0, %s108
      %s112 = sphi 0, %s111
      %s128 = sphi 0, %s112
      %s132 = sphi 0, %s132
      %s134 = sphi 0, %s132
      %s135 = sphi 0, %s134
      %s149 = sphi 0, %s135
      %s153 = sphi 0, %s153
      %s155 = sphi 0, %s153
      %s156 = sphi 0, %s155
      %s170 = sphi 0, %s156
      %s174 = sphi 0, %s174
      %s176 = sphi 0, %s174
      %s177 = sphi 0, %s176
      %s191 = sphi 0, %s177
      %s195 = sphi 0, %s195
      %s197 = sphi 0, %s195
      %s198 = sphi 0, %s197
      %s212 = sphi 0, %s198
      %s216 = sphi 0, %s216
      %s218 = sphi 0, %s216
      %s219 = sphi 0, %s218
      %s233 = sphi 0, %s219
      %s239 = sphi 0, %s241
      %s242 = sphi 0, %s239
      %s243 = sphi 0, %s242
      %s259 = sphi 0, %s243
    $region4: #{tpu_custom_call.1} parent=1 // loop_header_branch
      %31 = sbr.rel (%p29) target = $region8
    $region5: #{tpu_custom_call.1} parent=1 // loop_body
      %s33 = ssub.s32 %s28, 1
      %s34 = ssub.s32 %s28, 2
      %s41 = sadd.s32 1, %s36
      %p42 = scmp.ge.s32.totalorder %s41, 3
      %s43 = scalar_select %p42, 0, %s41
      %s44 = sadd.s32 1, %s35
      %s45 = scalar_select %p42, %s44, %s35
      %p46 = scmp.ge.s32.totalorder %s45, 3
      %s47 = scalar_select %p46, 0, %s45
      %s48 = sld [smem:[#allocation4 + %s35]]
      %p49 = scmp.gt.s32.totalorder %s36, %s48
      %s50 = scalar_select %p49, %s36, %s48
      %s51 = sld [smem:[#allocation5 + %s35]]
      %p52 = scmp.gt.s32.totalorder %s51, %s48
      %s53 = scalar_select %p52, %s51, %s48
      %p54 = scmp.lt.s32.totalorder %s50, %s53
      %s55 = scalar_select %p54, %s50, %s53
      %s56 = sld [smem:[#allocation4 + %s47]]
      %p57 = scmp.gt.s32.totalorder %s43, %s56
      %s58 = scalar_select %p57, %s43, %s56
      %s59 = sld [smem:[#allocation5 + %s47]]
      %p60 = scmp.gt.s32.totalorder %s59, %s56
      %s61 = scalar_select %p60, %s59, %s56
      %p62 = scmp.lt.s32.totalorder %s58, %s61
      %s63 = scalar_select %p62, %s58, %s61
      %s64 = ssub.s32 %s55, %s63
      %p65 = scmp.eq.s32.totalorder %s64, 0
      %s67 = sadd.s32 %s66, 1
      %s68 = scalar_select %p65, %s66, %s67
      %p71 = pneg %p65
      %p72 = scmp.eq.s32.totalorder %s28, 8
      %p73 = por %p71, %p72
      %p74 = scmp.ne.s32.totalorder %s66, %s69
      %p75 = scmp.eq.s32.totalorder %s28, 0
      %p76 = por %p74, %p75
      %p77 = scmp.ne.s32.totalorder %s66, %s69
      %p78 = scmp.eq.s32.totalorder %s33, 8
      %p79 = por %p77, %p78
      %p80 = scmp.ne.s32.totalorder %s69, %s70
      %p81 = scmp.eq.s32.totalorder %s33, 0
      %p82 = por %p80, %p81
      %p83 = scmp.ne.s32.totalorder %s69, %s70
      %p84 = scmp.eq.s32.totalorder %s34, 8
      %p85 = por %p83, %p84
      %p87 = scmp.ne.s32.totalorder %s70, %s86
      %p88 = scmp.eq.s32.totalorder %s34, 0
      %p89 = por %p87, %p88
      %s90 = sld [smem:[#allocation4 + %s35]]
      %p91 = scmp.gt.s32.totalorder %s36, %s90
      %s92 = scalar_select %p91, %s36, %s90
      %s93 = sld [smem:[#allocation5 + %s35]]
      %p94 = scmp.gt.s32.totalorder %s93, %s90
      %s95 = scalar_select %p94, %s93, %s90
      %p96 = scmp.lt.s32.totalorder %s92, %s95
      %s97 = scalar_select %p96, %s92, %s95
      %s98 = sld [smem:[#allocation4 + %s47]]
      %p99 = scmp.gt.s32.totalorder %s43, %s98
      %s100 = scalar_select %p99, %s43, %s98
      %s101 = sld [smem:[#allocation5 + %s47]]
      %p102 = scmp.gt.s32.totalorder %s101, %s98
      %s103 = scalar_select %p102, %s101, %s98
      %p104 = scmp.lt.s32.totalorder %s100, %s103
      %s105 = scalar_select %p104, %s100, %s103
      %s106 = ssub.s32 %s97, %s105
      %p107 = scmp.eq.s32.totalorder %s106, 0
      %s109 = sadd.s32 %s108, 1
      %s110 = scalar_select %p107, %s108, %s109
      %p113 = pneg %p107
      %p114 = scmp.eq.s32.totalorder %s28, 8
      %p115 = por %p113, %p114
      %p116 = scmp.ne.s32.totalorder %s108, %s111
      %p117 = scmp.eq.s32.totalorder %s28, 0
      %p118 = por %p116, %p117
      %p119 = scmp.ne.s32.totalorder %s108, %s111
      %p120 = scmp.eq.s32.totalorder %s33, 8
      %p121 = por %p119, %p120
      %p122 = scmp.ne.s32.totalorder %s111, %s112
      %p123 = scmp.eq.s32.totalorder %s33, 0
      %p124 = por %p122, %p123
      %p125 = scmp.ne.s32.totalorder %s111, %s112
      %p126 = scmp.eq.s32.totalorder %s34, 8
      %p127 = por %p125, %p126
      %p129 = scmp.ne.s32.totalorder %s112, %s128
      %p130 = scmp.eq.s32.totalorder %s34, 0
      %p131 = por %p129, %p130
      %s133 = sadd.s32 %s132, 1
      %p136 = scmp.eq.s32.totalorder %s28, 8
      %p137 = scmp.ne.s32.totalorder %s132, %s134
      %p138 = scmp.eq.s32.totalorder %s28, 0
      %p139 = por %p137, %p138
      %p140 = scmp.ne.s32.totalorder %s132, %s134
      %p141 = scmp.eq.s32.totalorder %s33, 8
      %p142 = por %p140, %p141
      %p143 = scmp.ne.s32.totalorder %s134, %s135
      %p144 = scmp.eq.s32.totalorder %s33, 0
      %p145 = por %p143, %p144
      %p146 = scmp.ne.s32.totalorder %s134, %s135
      %p147 = scmp.eq.s32.totalorder %s34, 8
      %p148 = por %p146, %p147
      %p150 = scmp.ne.s32.totalorder %s135, %s149
      %p151 = scmp.eq.s32.totalorder %s34, 0
      %p152 = por %p150, %p151
      %s154 = sadd.s32 %s153, 1
      %p157 = scmp.eq.s32.totalorder %s28, 8
      %p158 = scmp.ne.s32.totalorder %s153, %s155
      %p159 = scmp.eq.s32.totalorder %s28, 0
      %p160 = por %p158, %p159
      %p161 = scmp.ne.s32.totalorder %s153, %s155
      %p162 = scmp.eq.s32.totalorder %s33, 8
      %p163 = por %p161, %p162
      %p164 = scmp.ne.s32.totalorder %s155, %s156
      %p165 = scmp.eq.s32.totalorder %s33, 0
      %p166 = por %p164, %p165
      %p167 = scmp.ne.s32.totalorder %s155, %s156
      %p168 = scmp.eq.s32.totalorder %s34, 8
      %p169 = por %p167, %p168
      %p171 = scmp.ne.s32.totalorder %s156, %s170
      %p172 = scmp.eq.s32.totalorder %s34, 0
      %p173 = por %p171, %p172
      %s175 = sadd.s32 %s174, 1
      %p178 = scmp.eq.s32.totalorder %s28, 8
      %p179 = scmp.ne.s32.totalorder %s174, %s176
      %p180 = scmp.eq.s32.totalorder %s28, 0
      %p181 = por %p179, %p180
      %p182 = scmp.ne.s32.totalorder %s174, %s176
      %p183 = scmp.eq.s32.totalorder %s33, 8
      %p184 = por %p182, %p183
      %p185 = scmp.ne.s32.totalorder %s176, %s177
      %p186 = scmp.eq.s32.totalorder %s33, 0
      %p187 = por %p185, %p186
      %p188 = scmp.ne.s32.totalorder %s176, %s177
      %p189 = scmp.eq.s32.totalorder %s34, 8
      %p190 = por %p188, %p189
      %p192 = scmp.ne.s32.totalorder %s177, %s191
      %p193 = scmp.eq.s32.totalorder %s34, 0
      %p194 = por %p192, %p193
      %s196 = sadd.s32 %s195, 1
      %p199 = scmp.eq.s32.totalorder %s28, 8
      %p200 = scmp.ne.s32.totalorder %s195, %s197
      %p201 = scmp.eq.s32.totalorder %s28, 0
      %p202 = por %p200, %p201
      %p203 = scmp.ne.s32.totalorder %s195, %s197
      %p204 = scmp.eq.s32.totalorder %s33, 8
      %p205 = por %p203, %p204
      %p206 = scmp.ne.s32.totalorder %s197, %s198
      %p207 = scmp.eq.s32.totalorder %s33, 0
      %p208 = por %p206, %p207
      %p209 = scmp.ne.s32.totalorder %s197, %s198
      %p210 = scmp.eq.s32.totalorder %s34, 8
      %p211 = por %p209, %p210
      %p213 = scmp.ne.s32.totalorder %s198, %s212
      %p214 = scmp.eq.s32.totalorder %s34, 0
      %p215 = por %p213, %p214
      %s217 = sadd.s32 %s216, 1
      %p220 = scmp.eq.s32.totalorder %s28, 8
      %p221 = scmp.ne.s32.totalorder %s216, %s218
      %p222 = scmp.eq.s32.totalorder %s28, 0
      %p223 = por %p221, %p222
      %p224 = scmp.ne.s32.totalorder %s216, %s218
      %p225 = scmp.eq.s32.totalorder %s33, 8
      %p226 = por %p224, %p225
      %p227 = scmp.ne.s32.totalorder %s218, %s219
      %p228 = scmp.eq.s32.totalorder %s33, 0
      %p229 = por %p227, %p228
      %p230 = scmp.ne.s32.totalorder %s218, %s219
      %p231 = scmp.eq.s32.totalorder %s34, 8
      %p232 = por %p230, %p231
      %p234 = scmp.ne.s32.totalorder %s219, %s233
      %p235 = scmp.eq.s32.totalorder %s34, 0
      %p236 = por %p234, %p235
      %s237 = ssub.s32 %s35, %s47
      %p238 = scmp.eq.s32.totalorder %s237, 0
      %s240 = sadd.s32 %s239, 1
      %s241 = scalar_select %p238, %s239, %s240
      %p244 = pneg %p238
      %p245 = scmp.eq.s32.totalorder %s28, 8
      %p246 = por %p244, %p245
      %p247 = scmp.ne.s32.totalorder %s239, %s242
      %p248 = scmp.eq.s32.totalorder %s28, 0
      %p249 = por %p247, %p248
      %p250 = scmp.ne.s32.totalorder %s239, %s242
      %p251 = scmp.eq.s32.totalorder %s33, 8
      %p252 = por %p250, %p251
      %p253 = scmp.ne.s32.totalorder %s242, %s243
      %p254 = scmp.eq.s32.totalorder %s33, 0
      %p255 = por %p253, %p254
      %p256 = scmp.ne.s32.totalorder %s242, %s243
      %p257 = scmp.eq.s32.totalorder %s34, 8
      %p258 = por %p256, %p257
      %p260 = scmp.ne.s32.totalorder %s243, %s259
      %p261 = scmp.eq.s32.totalorder %s34, 0
      %p262 = por %p260, %p261
      %p263 = scmp.le.s32.totalorder 1, %s28
      %p264 = scmp.lt.s32.totalorder %s28, 10
      %p265 = pnand %p263, %p264
      %p266 = pneg %p265
      // Predicated region
      $region9: #{tpu_custom_call.1} parent=5 // pred_check
        _
      $region10: #{tpu_custom_call.1} parent=5 // pred_check_branch
        %268 = sbr.rel (%p265) target = $region12
      $region11: #{tpu_custom_call.1} parent=5 // pred_region
        %s269 = ssub.s32 %s28, 1
        // Predicated region
        $region13: #{tpu_custom_call.1} parent=11 // pred_check
          %p270 = pneg %p145
        $region14: #{tpu_custom_call.1} parent=11 // pred_check_branch
          %272 = sbr.rel (%p270) target = $region16
        $region15: #{tpu_custom_call.1} parent=11 // pred_region
          _
        $region16: #{tpu_custom_call.1} parent=11 // pred_fallthru
          _
        // Predicated region
        $region17: #{tpu_custom_call.1} parent=11 // pred_check
          %p273 = pneg %p166
        $region18: #{tpu_custom_call.1} parent=11 // pred_check_branch
          %275 = sbr.rel (%p273) target = $region20
        $region19: #{tpu_custom_call.1} parent=11 // pred_region
          _
        $region20: #{tpu_custom_call.1} parent=11 // pred_fallthru
          _
        // Predicated region
        $region21: #{tpu_custom_call.1} parent=11 // pred_check
          %p276 = pneg %p187
        $region22: #{tpu_custom_call.1} parent=11 // pred_check_branch
          %278 = sbr.rel (%p276) target = $region24
        $region23: #{tpu_custom_call.1} parent=11 // pred_region
          _
        $region24: #{tpu_custom_call.1} parent=11 // pred_fallthru
          _
        // Predicated region
        $region25: #{tpu_custom_call.1} parent=11 // pred_check
          %p279 = pneg %p208
        $region26: #{tpu_custom_call.1} parent=11 // pred_check_branch
          %281 = sbr.rel (%p279) target = $region28
        $region27: #{tpu_custom_call.1} parent=11 // pred_region
          _
        $region28: #{tpu_custom_call.1} parent=11 // pred_fallthru
          _
        // Predicated region
        $region29: #{tpu_custom_call.1} parent=11 // pred_check
          %p282 = pneg %p229
        $region30: #{tpu_custom_call.1} parent=11 // pred_check_branch
          %284 = sbr.rel (%p282) target = $region32
        $region31: #{tpu_custom_call.1} parent=11 // pred_region
          _
        $region32: #{tpu_custom_call.1} parent=11 // pred_fallthru
          _
      $region12: #{tpu_custom_call.1} parent=5 // pred_fallthru
        _
      %p285 = scmp.lt.s32.totalorder %s28, 9
      // Predicated region
      $region33: #{tpu_custom_call.1} parent=5 // pred_check
        %p286 = pneg %p285
      $region34: #{tpu_custom_call.1} parent=5 // pred_check_branch
        %288 = sbr.rel (%p286) target = $region36
      $region35: #{tpu_custom_call.1} parent=5 // pred_region
        // Predicated region
        $region37: #{tpu_custom_call.1} parent=35 // pred_check
          %p289 = pneg %p76
        $region38: #{tpu_custom_call.1} parent=35 // pred_check_branch
          %291 = sbr.rel (%p289) target = $region40
        $region39: #{tpu_custom_call.1} parent=35 // pred_region
          %s292 = sld [smem:[#allocation4 + %s35]]
          %p293 = scmp.gt.s32.totalorder %s36, %s292
          %s294 = scalar_select %p293, %s36, %s292
          %s295 = sld [smem:[#allocation5 + %s35]]
          %p296 = scmp.gt.s32.totalorder %s295, %s292
          %s297 = scalar_select %p296, %s295, %s292
          %p298 = scmp.lt.s32.totalorder %s294, %s297
          %s299 = scalar_select %p298, %s294, %s297
          %p300 = scmp.lt.s32.totalorder %s299, 2
          %s301 = scalar_select %p300, %s299, 2
          %s302 = scalar_lea.vmem %s2, %s301
          %s303 = sld [smem:[#allocation4 + %s35]]
          %p304 = scmp.gt.s32.totalorder %s36, %s303
          %s305 = scalar_select %p304, %s36, %s303
          %s306 = sld [smem:[#allocation5 + %s35]]
          %p307 = scmp.gt.s32.totalorder %s306, %s303
          %s308 = scalar_select %p307, %s306, %s303
          %p309 = scmp.lt.s32.totalorder %s305, %s308
          %s310 = scalar_select %p309, %s305, %s308
        $region40: #{tpu_custom_call.1} parent=35 // pred_fallthru
          _
        // Predicated region
        $region41: #{tpu_custom_call.1} parent=35 // pred_check
          %p311 = pneg %p118
        $region42: #{tpu_custom_call.1} parent=35 // pred_check_branch
          %313 = sbr.rel (%p311) target = $region44
        $region43: #{tpu_custom_call.1} parent=35 // pred_region
          %s314 = sld [smem:[#allocation4 + %s35]]
          %p315 = scmp.gt.s32.totalorder %s36, %s314
          %s316 = scalar_select %p315, %s36, %s314
          %s317 = sld [smem:[#allocation5 + %s35]]
          %p318 = scmp.gt.s32.totalorder %s317, %s314
          %s319 = scalar_select %p318, %s317, %s314
          %p320 = scmp.lt.s32.totalorder %s316, %s319
          %s321 = scalar_select %p320, %s316, %s319
          %s322 = smul.u32 16, %s321
          %p323 = scmp.lt.s32.totalorder %s322, 47
          %s324 = scalar_select %p323, %s322, 47
          %s325 = smul.addr %s324, 8
          %s326 = scalar_lea.vmem %s3, %s325
          %s327 = sld [smem:[#allocation4 + %s35]]
          %p328 = scmp.gt.s32.totalorder %s36, %s327
          %s329 = scalar_select %p328, %s36, %s327
          %s330 = sld [smem:[#allocation5 + %s35]]
          %p331 = scmp.gt.s32.totalorder %s330, %s327
          %s332 = scalar_select %p331, %s330, %s327
          %p333 = scmp.lt.s32.totalorder %s329, %s332
          %s334 = scalar_select %p333, %s329, %s332
          %s335 = smul.u32 16, %s334
        $region44: #{tpu_custom_call.1} parent=35 // pred_fallthru
          _
      $region36: #{tpu_custom_call.1} parent=5 // pred_fallthru
        _
      %p336 = scmp.le.s32.totalorder 1, %s28
      %p337 = scmp.lt.s32.totalorder %s28, 10
      %p338 = pnand %p336, %p337
      %p339 = pneg %p338
      // Predicated region
      $region45: #{tpu_custom_call.1} parent=5 // pred_check
        _
      $region46: #{tpu_custom_call.1} parent=5 // pred_check_branch
        %341 = sbr.rel (%p338) target = $region48
      $region47: #{tpu_custom_call.1} parent=5 // pred_region
        %s342 = ssub.s32 %s28, 1
        %s343 = sld [smem:[#allocation4 + %s37]]
        %p344 = scmp.gt.s32.totalorder %s38, %s343
        %s345 = scalar_select %p344, %s38, %s343
        %s346 = sld [smem:[#allocation5 + %s37]]
        %p347 = scmp.gt.s32.totalorder %s346, %s343
        %s348 = scalar_select %p347, %s346, %s343
        %p349 = scmp.lt.s32.totalorder %s345, %s348
        %s350 = scalar_select %p349, %s345, %s348
        %p351 = scmp.lt.s32.totalorder %s350, 2
        %s352 = scalar_select %p351, %s350, 2
        %s353 = scalar_lea.vmem %s2, %s352
        %p354 = pneg %p82
        %p355 = pneg %p79
        %s356 = sld [smem:[#allocation4 + %s37]]
        %p357 = scmp.gt.s32.totalorder %s38, %s356
        %s358 = scalar_select %p357, %s38, %s356
        %s359 = sld [smem:[#allocation5 + %s37]]
        %p360 = scmp.gt.s32.totalorder %s359, %s356
        %s361 = scalar_select %p360, %s359, %s356
        %p362 = scmp.lt.s32.totalorder %s358, %s361
        %s363 = scalar_select %p362, %s358, %s361
        %s364 = smul.u32 16, %s363
        %p365 = scmp.lt.s32.totalorder %s364, 47
        %s366 = scalar_select %p365, %s364, 47
        %s367 = smul.addr %s366, 8
        %s368 = scalar_lea.vmem %s3, %s367
        %p369 = pneg %p124
        %p370 = pneg %p121
        %p371 = pneg %p145
        %p372 = pneg %p142
        %p373 = pneg %p166
        %p374 = pneg %p163
        %p375 = pneg %p187
        %p376 = pneg %p184
        %p377 = pneg %p208
        %p378 = pneg %p205
        %p379 = pneg %p229
        %p380 = pneg %p226
        %p381 = pneg %p255
        %p382 = pneg %p252
        %s383 = sand.u32 %s242, 1
        %s384 = scalar_lea.sflag [#allocation7], %s383
        %s385 = sand.u32 %s242, 1
        %s386 = smul.addr %s385, 16
        %s387 = scalar_lea.vmem [#allocation6], %s386
        %s388 = sld [smem:[#allocation4 + %s37]]
        %p389 = scmp.gt.s32.totalorder %s38, %s388
        %s390 = scalar_select %p389, %s38, %s388
        %s391 = sld [smem:[#allocation5 + %s37]]
        %p392 = scmp.gt.s32.totalorder %s391, %s388
        %s393 = scalar_select %p392, %s391, %s388
        %p394 = scmp.lt.s32.totalorder %s390, %s393
        %s395 = scalar_select %p394, %s390, %s393
        %p396 = scmp.lt.s32.totalorder %s395, 2
        %s397 = scalar_select %p396, %s395, 2
        %s398 = scalar_lea.vmem %s2, %s397
        %s399 = sld [smem:[#allocation4 + %s37]]
        %p400 = scmp.gt.s32.totalorder %s38, %s399
        %s401 = scalar_select %p400, %s38, %s399
        %s402 = sld [smem:[#allocation5 + %s37]]
        %p403 = scmp.gt.s32.totalorder %s402, %s399
        %s404 = scalar_select %p403, %s402, %s399
        %p405 = scmp.lt.s32.totalorder %s401, %s404
        %s406 = scalar_select %p405, %s401, %s404
        %s407 = sld [smem:[#allocation4 + %s37]]
        %p408 = scmp.gt.s32.totalorder %s38, %s407
        %s409 = scalar_select %p408, %s38, %s407
        %s410 = sld [smem:[#allocation5 + %s37]]
        %p411 = scmp.gt.s32.totalorder %s410, %s407
        %s412 = scalar_select %p411, %s410, %s407
        %p413 = scmp.lt.s32.totalorder %s409, %s412
        %s414 = scalar_select %p413, %s409, %s412
        %s415 = smul.u32 16, %s414
        %p416 = scmp.lt.s32.totalorder %s415, 47
        %s417 = scalar_select %p416, %s415, 47
        %s418 = smul.addr %s417, 8
        %s419 = scalar_lea.vmem %s3, %s418
        %s420 = sld [smem:[#allocation4 + %s37]]
        %p421 = scmp.gt.s32.totalorder %s38, %s420
        %s422 = scalar_select %p421, %s38, %s420
        %s423 = sld [smem:[#allocation5 + %s37]]
        %p424 = scmp.gt.s32.totalorder %s423, %s420
        %s425 = scalar_select %p424, %s423, %s420
        %p426 = scmp.lt.s32.totalorder %s422, %s425
        %s427 = scalar_select %p426, %s422, %s425
        %s428 = smul.u32 16, %s427
        %s429 = smul.u32 2, %s37
        %p430 = scmp.eq.s32.totalorder %s38, 0
        // Predicated region
        $region49: #{tpu_custom_call.1} parent=47 // pred_check
          %p431 = pneg %p430
        $region50: #{tpu_custom_call.1} parent=47 // pred_check_branch
          %433 = sbr.rel (%p431) target = $region52
        $region51: #{tpu_custom_call.1} parent=47 // pred_region
          %vm434 = vcmask 261120
          %435 = vst.msk [vmem:[#allocation2] sm:$0xff] %vm434, 0.0
          %436 = vst.msk [vmem:[#allocation2 + $0x8] sm:$0xff] %vm434, 0.0
        $region52: #{tpu_custom_call.1} parent=47 // pred_fallthru
          _
        %s437 = sld [smem:[#allocation4 + %s37]]
        %p438 = scmp.ge.s32.totalorder %s38, %s437
        %s439 = sld [smem:[#allocation5 + %s37]]
        %p440 = scmp.le.s32.totalorder %s38, %s439
        %p441 = pnand %p438, %p440
        %p442 = pneg %p441
        // Predicated region
        $region53: #{tpu_custom_call.1} parent=47 // pred_check
          _
        $region54: #{tpu_custom_call.1} parent=47 // pred_check_branch
          %444 = sbr.rel (%p441) target = $region56
        $region55: #{tpu_custom_call.1} parent=47 // pred_region
          %s445 = smul.u32 %s37, 16
          %v446 = vlaneseq
          %v447 = vshrl.u32 %v446, 7
          %v448 = vadd.s32 %v447, 8
          %v449 = vstv %s445
          %v450 = vadd.s32 %v449, %v447
          %v451 = vadd.s32 %v449, %v448
          %v452 = vld [vmem:[%s398] sm:$0x1]
          %v453 = vlaneseq
          %v454 = vshrl.u32 %v453, 7
          %v455 = vsub.s32 0, %v454
          %v456 = vrot.slane %v452, %v455
          %vm457 = vcmp.eq.s32.totalorder %v450, %v456
          %vm458 = vcmp.eq.s32.totalorder %v451, %v456
          %v459 = vsel %vm457, 1, 0
          %v460 = vsel %vm458, 1, 0
          %v461 = vcvt.s32.f32 %v459
          %v462 = vcvt.s32.f32 %v460
          %v463 = vld [vmem:[#allocation2] sm:$0xff]
          %v464 = vld [vmem:[#allocation2 + $0x8] sm:$0xff]
          %v465 = vld [vmem:[%s419] sm:$0xff]
          %v466 = vld [vmem:[%s419 + $0x8] sm:$0xff]
          %v467 = vld [vmem:[%s419 + $0x10] sm:$0xff]
          %v468 = vld [vmem:[%s419 + $0x18] sm:$0xff]
          %v469 = vld [vmem:[%s419 + $0x20] sm:$0xff]
          %v470 = vld [vmem:[%s419 + $0x28] sm:$0xff]
          %v471 = vld [vmem:[%s419 + $0x30] sm:$0xff]
          %v472 = vld [vmem:[%s419 + $0x38] sm:$0xff]
          %v473 = vld [vmem:[%s419 + $0x40] sm:$0xff]
          %v474 = vld [vmem:[%s419 + $0x48] sm:$0xff]
          %v475 = vld [vmem:[%s419 + $0x50] sm:$0xff]
          %v476 = vld [vmem:[%s419 + $0x58] sm:$0xff]
          %v477 = vld [vmem:[%s419 + $0x60] sm:$0xff]
          %v478 = vld [vmem:[%s419 + $0x68] sm:$0xff]
          %v479 = vld [vmem:[%s419 + $0x70] sm:$0xff]
          %v480 = vld [vmem:[%s419 + $0x78] sm:$0xff]
          %481 = vmatprep.subr.mxu0 0.0
          %482 = vmatpush1.msra.mxu0 %v465
          %483 = vmatprep.subr.mxu0 0.0
          %484 = vmatpush1.msra.mxu0 %v466
          %485 = vmatprep.subr.mxu0 0.0
          %486 = vmatpush1.msra.mxu0 %v467
          %487 = vmatprep.subr.mxu0 0.0
          %488 = vmatpush1.msra.mxu0 %v468
          %489 = vmatprep.subr.mxu0 0.0
          %490 = vmatpush1.msra.mxu0 %v469
          %491 = vmatprep.subr.mxu0 0.0
          %492 = vmatpush1.msra.mxu0 %v470
          %493 = vmatprep.subr.mxu0 0.0
          %494 = vmatpush1.msra.mxu0 %v471
          %495 = vmatprep.subr.mxu0 0.0
          %496 = vmatpush1.msra.mxu0 %v472
          %497 = vmatprep.subr.mxu0 0.0
          %498 = vmatpush1.msra.mxu0 %v473
          %499 = vmatprep.subr.mxu0 0.0
          %500 = vmatpush1.msra.mxu0 %v474
          %501 = vmatprep.subr.mxu0 0.0
          %502 = vmatpush1.msra.mxu0 %v475
          %503 = vmatprep.subr.mxu0 0.0
          %504 = vmatpush1.msra.mxu0 %v476
          %505 = vmatprep.subr.mxu0 0.0
          %506 = vmatpush1.msra.mxu0 %v477
          %507 = vmatprep.subr.mxu0 0.0
          %508 = vmatpush1.msra.mxu0 %v478
          %509 = vmatprep.subr.mxu0 0.0
          %510 = vmatpush1.msra.mxu0 %v479
          %511 = vmatprep.subr.mxu0 0.0
          %512 = vmatpush1.msra.mxu0 %v480
          %513 = vmatprep.subr.mxu0 0.0
          %514 = vmatpush1.msra.mxu0 0.0
          %515 = vmatprep.subr.mxu0 0.0
          %516 = vmatpush1.msra.mxu0 0.0
          %517 = vmatprep.subr.mxu0 0.0
          %518 = vmatpush1.msra.mxu0 0.0
          %519 = vmatprep.subr.mxu0 0.0
          %520 = vmatpush1.msra.mxu0 0.0
          %521 = vmatprep.subr.mxu0 0.0
          %522 = vmatpush1.msra.mxu0 0.0
          %523 = vmatprep.subr.mxu0 0.0
          %524 = vmatpush1.msra.mxu0 0.0
          %525 = vmatprep.subr.mxu0 0.0
          %526 = vmatpush1.msra.mxu0 0.0
          %527 = vmatprep.subr.mxu0 0.0
          %528 = vmatpush1.msra.mxu0 0.0
          %529 = vmatprep.subr.mxu0 0.0
          %530 = vmatpush1.msra.mxu0 0.0
          %531 = vmatprep.subr.mxu0 0.0
          %532 = vmatpush1.msra.mxu0 0.0
          %533 = vmatprep.subr.mxu0 0.0
          %534 = vmatpush1.msra.mxu0 0.0
          %535 = vmatprep.subr.mxu0 0.0
          %536 = vmatpush1.msra.mxu0 0.0
          %537 = vmatprep.subr.mxu0 0.0
          %538 = vmatpush1.msra.mxu0 0.0
          %539 = vmatprep.subr.mxu0 0.0
          %540 = vmatpush1.msra.mxu0 0.0
          %541 = vmatprep.subr.mxu0 0.0
          %542 = vmatpush1.msra.mxu0 0.0
          %543 = vmatprep.subr.mxu0 0.0
          %544 = vmatpush1.msra.mxu0 0.0
          %545 = vmatprep.mubr.f32.mxu0 0.0
          %546 = vmatmul.mubr.f32.gmra.mrb[0].mxu0 %v461
          %v547 = vpop.f32.mrb[0].mxu0
          %v548 = vadd.f32 0.0, %v547
          %v549 = vpop.f32.mrb[0].mxu0
          %550 = vmatprep.mubr.f32.mxu0 0.0
          %551 = vmatmul.mubr.f32.gmra.mrb[0].mxu0 %v462
          %v552 = vpop.f32.mrb[0].mxu0
          %v553 = vadd.f32 0.0, %v552
          %v554 = vpop.f32.mrb[0].mxu0
          %555 = vdwg.mxu0
          %v556 = vadd.f32 %v463, %v548
          %v557 = vadd.f32 %v464, %v553
          %vm558 = vcmask 261120
          %559 = vst.msk [vmem:[#allocation2] sm:$0xff] %vm558, %v556
          %560 = vst.msk [vmem:[#allocation2 + $0x8] sm:$0xff] %vm558, %v557
        $region56: #{tpu_custom_call.1} parent=47 // pred_fallthru
          _
        %p561 = scmp.eq.s32.totalorder %s38, 2
        // Predicated region
        $region57: #{tpu_custom_call.1} parent=47 // pred_check
          %p562 = pneg %p561
        $region58: #{tpu_custom_call.1} parent=47 // pred_check_branch
          %564 = sbr.rel (%p562) target = $region60
        $region59: #{tpu_custom_call.1} parent=47 // pred_region
          %v565 = vld [vmem:[#allocation2] sm:$0xff]
          %v566 = vld [vmem:[#allocation2 + $0x8] sm:$0xff]
          %v567 = vld [vmem:[%s4] sm:$0xff]
          %v568 = vld [vmem:[%s4 + $0x8] sm:$0xff]
          %v569 = vld [vmem:[%s4 + $0x10] sm:$0xff]
          %v570 = vld [vmem:[%s4 + $0x18] sm:$0xff]
          %v571 = vld [vmem:[%s5] sm:$0x1]
          %v573 = vlaneseq
          %v574 = vshrl.u32 %v573, 7
          %v575 = vsub.s32 0, %v574
          %v576 = vrot.slane %v571, %v575
          %vm578 = vcmask 261120
          %v580 = vsel %vm578, %v565, 0
          %v583 = vsel %vm578, %v566, 0
          %585 = vmatprep.subr.mxu0 0.0
          %586 = vmatpush1.msra.mxu0 %v567
          %587 = vmatprep.subr.mxu0 0.0
          %588 = vmatpush1.msra.mxu0 %v568
          %589 = vmatprep.subr.mxu0 0.0
          %590 = vmatpush1.msra.mxu0 %v569
          %591 = vmatprep.subr.mxu0 0.0
          %592 = vmatpush1.msra.mxu0 %v570
          %593 = vmatprep.subr.mxu0 0.0
          %594 = vmatpush1.msra.mxu0 0.0
          %595 = vmatprep.subr.mxu0 0.0
          %596 = vmatpush1.msra.mxu0 0.0
          %597 = vmatprep.subr.mxu0 0.0
          %598 = vmatpush1.msra.mxu0 0.0
          %599 = vmatprep.subr.mxu0 0.0
          %600 = vmatpush1.msra.mxu0 0.0
          %601 = vmatprep.subr.mxu0 0.0
          %602 = vmatpush1.msra.mxu0 0.0
          %603 = vmatprep.subr.mxu0 0.0
          %604 = vmatpush1.msra.mxu0 0.0
          %605 = vmatprep.subr.mxu0 0.0
          %606 = vmatpush1.msra.mxu0 0.0
          %607 = vmatprep.subr.mxu0 0.0
          %608 = vmatpush1.msra.mxu0 0.0
          %609 = vmatprep.subr.mxu0 0.0
          %610 = vmatpush1.msra.mxu0 0.0
          %611 = vmatprep.subr.mxu0 0.0
          %612 = vmatpush1.msra.mxu0 0.0
          %613 = vmatprep.subr.mxu0 0.0
          %614 = vmatpush1.msra.mxu0 0.0
          %615 = vmatprep.subr.mxu0 0.0
          %616 = vmatpush1.msra.mxu0 0.0
          %617 = vmatprep.subr.mxu0 0.0
          %618 = vmatpush1.msra.mxu0 0.0
          %619 = vmatprep.subr.mxu0 0.0
          %620 = vmatpush1.msra.mxu0 0.0
          %621 = vmatprep.subr.mxu0 0.0
          %622 = vmatpush1.msra.mxu0 0.0
          %623 = vmatprep.subr.mxu0 0.0
          %624 = vmatpush1.msra.mxu0 0.0
          %625 = vmatprep.subr.mxu0 0.0
          %626 = vmatpush1.msra.mxu0 0.0
          %627 = vmatprep.subr.mxu0 0.0
          %628 = vmatpush1.msra.mxu0 0.0
          %629 = vmatprep.subr.mxu0 0.0
          %630 = vmatpush1.msra.mxu0 0.0
          %631 = vmatprep.subr.mxu0 0.0
          %632 = vmatpush1.msra.mxu0 0.0
          %633 = vmatprep.subr.mxu0 0.0
          %634 = vmatpush1.msra.mxu0 0.0
          %635 = vmatprep.subr.mxu0 0.0
          %636 = vmatpush1.msra.mxu0 0.0
          %637 = vmatprep.subr.mxu0 0.0
          %638 = vmatpush1.msra.mxu0 0.0
          %639 = vmatprep.subr.mxu0 0.0
          %640 = vmatpush1.msra.mxu0 0.0
          %641 = vmatprep.subr.mxu0 0.0
          %642 = vmatpush1.msra.mxu0 0.0
          %643 = vmatprep.subr.mxu0 0.0
          %644 = vmatpush1.msra.mxu0 0.0
          %645 = vmatprep.subr.mxu0 0.0
          %646 = vmatpush1.msra.mxu0 0.0
          %647 = vmatprep.subr.mxu0 0.0
          %648 = vmatpush1.msra.mxu0 0.0
          %649 = vmatprep.mubr.f32.mxu0 0.0
          %650 = vmatmul.mubr.f32.gmra.mrb[0].mxu0 %v580
          %v651 = vpop.f32.mrb[0].mxu0
          %v652 = vadd.f32 %v576, %v651
          %v653 = vpop.f32.mrb[0].mxu0
          %654 = vmatprep.mubr.f32.mxu0 0.0
          %655 = vmatmul.mubr.f32.gmra.mrb[0].mxu0 %v583
          %v656 = vpop.f32.mrb[0].mxu0
          %v657 = vadd.f32 %v576, %v656
          %v658 = vpop.f32.mrb[0].mxu0
          %659 = vdwg.mxu0
          %v660 = vld [vmem:[%s6] sm:$0xff]
          %v661 = vld [vmem:[%s6 + $0x8] sm:$0xff]
          %v662 = vld [vmem:[%s6 + $0x10] sm:$0xff]
          %v663 = vld [vmem:[%s6 + $0x18] sm:$0xff]
          %v664 = vld [vmem:[%s7] sm:$0x1]
          %v666 = vlaneseq
          %v667 = vshrl.u32 %v666, 7
          %v668 = vsub.s32 0, %v667
          %v669 = vrot.slane %v664, %v668
          %v672 = vsel %vm578, %v652, 0
          %v675 = vsel %vm578, %v657, 0
          %677 = vmatprep.subr.mxu0 0.0
          %678 = vmatpush1.msra.mxu0 %v660
          %679 = vmatprep.subr.mxu0 0.0
          %680 = vmatpush1.msra.mxu0 %v661
          %681 = vmatprep.subr.mxu0 0.0
          %682 = vmatpush1.msra.mxu0 %v662
          %683 = vmatprep.subr.mxu0 0.0
          %684 = vmatpush1.msra.mxu0 %v663
          %685 = vmatprep.subr.mxu0 0.0
          %686 = vmatpush1.msra.mxu0 0.0
          %687 = vmatprep.subr.mxu0 0.0
          %688 = vmatpush1.msra.mxu0 0.0
          %689 = vmatprep.subr.mxu0 0.0
          %690 = vmatpush1.msra.mxu0 0.0
          %691 = vmatprep.subr.mxu0 0.0
          %692 = vmatpush1.msra.mxu0 0.0
          %693 = vmatprep.subr.mxu0 0.0
          %694 = vmatpush1.msra.mxu0 0.0
          %695 = vmatprep.subr.mxu0 0.0
          %696 = vmatpush1.msra.mxu0 0.0
          %697 = vmatprep.subr.mxu0 0.0
          %698 = vmatpush1.msra.mxu0 0.0
          %699 = vmatprep.subr.mxu0 0.0
          %700 = vmatpush1.msra.mxu0 0.0
          %701 = vmatprep.subr.mxu0 0.0
          %702 = vmatpush1.msra.mxu0 0.0
          %703 = vmatprep.subr.mxu0 0.0
          %704 = vmatpush1.msra.mxu0 0.0
          %705 = vmatprep.subr.mxu0 0.0
          %706 = vmatpush1.msra.mxu0 0.0
          %707 = vmatprep.subr.mxu0 0.0
          %708 = vmatpush1.msra.mxu0 0.0
          %709 = vmatprep.subr.mxu0 0.0
          %710 = vmatpush1.msra.mxu0 0.0
          %711 = vmatprep.subr.mxu0 0.0
          %712 = vmatpush1.msra.mxu0 0.0
          %713 = vmatprep.subr.mxu0 0.0
          %714 = vmatpush1.msra.mxu0 0.0
          %715 = vmatprep.subr.mxu0 0.0
          %716 = vmatpush1.msra.mxu0 0.0
          %717 = vmatprep.subr.mxu0 0.0
          %718 = vmatpush1.msra.mxu0 0.0
          %719 = vmatprep.subr.mxu0 0.0
          %720 = vmatpush1.msra.mxu0 0.0
          %721 = vmatprep.subr.mxu0 0.0
          %722 = vmatpush1.msra.mxu0 0.0
          %723 = vmatprep.subr.mxu0 0.0
          %724 = vmatpush1.msra.mxu0 0.0
          %725 = vmatprep.subr.mxu0 0.0
          %726 = vmatpush1.msra.mxu0 0.0
          %727 = vmatprep.subr.mxu0 0.0
          %728 = vmatpush1.msra.mxu0 0.0
          %729 = vmatprep.subr.mxu0 0.0
          %730 = vmatpush1.msra.mxu0 0.0
          %731 = vmatprep.subr.mxu0 0.0
          %732 = vmatpush1.msra.mxu0 0.0
          %733 = vmatprep.subr.mxu0 0.0
          %734 = vmatpush1.msra.mxu0 0.0
          %735 = vmatprep.subr.mxu0 0.0
          %736 = vmatpush1.msra.mxu0 0.0
          %737 = vmatprep.subr.mxu0 0.0
          %738 = vmatpush1.msra.mxu0 0.0
          %739 = vmatprep.subr.mxu0 0.0
          %740 = vmatpush1.msra.mxu0 0.0
          %741 = vmatprep.mubr.f32.mxu0 0.0
          %742 = vmatmul.mubr.f32.gmra.mrb[0].mxu0 %v672
          %v743 = vpop.f32.mrb[0].mxu0
          %v744 = vadd.f32 %v669, %v743
          %v745 = vpop.f32.mrb[0].mxu0
          %746 = vmatprep.mubr.f32.mxu0 0.0
          %747 = vmatmul.mubr.f32.gmra.mrb[0].mxu0 %v675
          %v748 = vpop.f32.mrb[0].mxu0
          %v749 = vadd.f32 %v669, %v748
          %v750 = vpop.f32.mrb[0].mxu0
          %751 = vdwg.mxu0
          %v752 = vxor.u32 %v744, 2147483648
          %v753 = vxor.u32 %v749, 2147483648
          %v754 = vmul.f32 %v752, 1.442695
          %v755 = vpow.pop %v754
          %v756 = vmul.f32 %v753, 1.442695
          %v757 = vpow.pop %v756
          %v758 = vadd.f32 %v755, 1.0
          %v759 = vadd.f32 %v757, 1.0
          %v760 = vrcp.pop %v758
          %v761 = vmul.f32 1.0, %v760
          %v762 = vrcp.pop %v759
          %v763 = vmul.f32 1.0, %v762
          %v764 = vmul.f32 %v744, %v761
          %v765 = vmul.f32 %v749, %v763
          %s766 = scalar_lea.vmem %s6, 32
          %v767 = vld [vmem:[%s766] sm:$0xff]
          %v768 = vld [vmem:[%s766 + $0x8] sm:$0xff]
          %v769 = vld [vmem:[%s766 + $0x10] sm:$0xff]
          %v770 = vld [vmem:[%s766 + $0x18] sm:$0xff]
          %s771 = scalar_lea.vmem %s7, 1
          %v772 = vld [vmem:[%s771] sm:$0x1]
          %v774 = vlaneseq
          %v775 = vshrl.u32 %v774, 7
          %v776 = vsub.s32 0, %v775
          %v777 = vrot.slane %v772, %v776
          %v780 = vsel %vm578, %v764, 0
          %v783 = vsel %vm578, %v765, 0
          %785 = vmatprep.subr.mxu0 0.0
          %786 = vmatpush1.msra.mxu0 %v767
          %787 = vmatprep.subr.mxu0 0.0
          %788 = vmatpush1.msra.mxu0 %v768
          %789 = vmatprep.subr.mxu0 0.0
          %790 = vmatpush1.msra.mxu0 %v769
          %791 = vmatprep.subr.mxu0 0.0
          %792 = vmatpush1.msra.mxu0 %v770
          %793 = vmatprep.subr.mxu0 0.0
          %794 = vmatpush1.msra.mxu0 0.0
          %795 = vmatprep.subr.mxu0 0.0
          %796 = vmatpush1.msra.mxu0 0.0
          %797 = vmatprep.subr.mxu0 0.0
          %798 = vmatpush1.msra.mxu0 0.0
          %799 = vmatprep.subr.mxu0 0.0
          %800 = vmatpush1.msra.mxu0 0.0
          %801 = vmatprep.subr.mxu0 0.0
          %802 = vmatpush1.msra.mxu0 0.0
          %803 = vmatprep.subr.mxu0 0.0
          %804 = vmatpush1.msra.mxu0 0.0
          %805 = vmatprep.subr.mxu0 0.0
          %806 = vmatpush1.msra.mxu0 0.0
          %807 = vmatprep.subr.mxu0 0.0
          %808 = vmatpush1.msra.mxu0 0.0
          %809 = vmatprep.subr.mxu0 0.0
          %810 = vmatpush1.msra.mxu0 0.0
          %811 = vmatprep.subr.mxu0 0.0
          %812 = vmatpush1.msra.mxu0 0.0
          %813 = vmatprep.subr.mxu0 0.0
          %814 = vmatpush1.msra.mxu0 0.0
          %815 = vmatprep.subr.mxu0 0.0
          %816 = vmatpush1.msra.mxu0 0.0
          %817 = vmatprep.subr.mxu0 0.0
          %818 = vmatpush1.msra.mxu0 0.0
          %819 = vmatprep.subr.mxu0 0.0
          %820 = vmatpush1.msra.mxu0 0.0
          %821 = vmatprep.subr.mxu0 0.0
          %822 = vmatpush1.msra.mxu0 0.0
          %823 = vmatprep.subr.mxu0 0.0
          %824 = vmatpush1.msra.mxu0 0.0
          %825 = vmatprep.subr.mxu0 0.0
          %826 = vmatpush1.msra.mxu0 0.0
          %827 = vmatprep.subr.mxu0 0.0
          %828 = vmatpush1.msra.mxu0 0.0
          %829 = vmatprep.subr.mxu0 0.0
          %830 = vmatpush1.msra.mxu0 0.0
          %831 = vmatprep.subr.mxu0 0.0
          %832 = vmatpush1.msra.mxu0 0.0
          %833 = vmatprep.subr.mxu0 0.0
          %834 = vmatpush1.msra.mxu0 0.0
          %835 = vmatprep.subr.mxu0 0.0
          %836 = vmatpush1.msra.mxu0 0.0
          %837 = vmatprep.subr.mxu0 0.0
          %838 = vmatpush1.msra.mxu0 0.0
          %839 = vmatprep.subr.mxu0 0.0
          %840 = vmatpush1.msra.mxu0 0.0
          %841 = vmatprep.subr.mxu0 0.0
          %842 = vmatpush1.msra.mxu0 0.0
          %843 = vmatprep.subr.mxu0 0.0
          %844 = vmatpush1.msra.mxu0 0.0
          %845 = vmatprep.subr.mxu0 0.0
          %846 = vmatpush1.msra.mxu0 0.0
          %847 = vmatprep.subr.mxu0 0.0
          %848 = vmatpush1.msra.mxu0 0.0
          %849 = vmatprep.mubr.f32.mxu0 0.0
          %850 = vmatmul.mubr.f32.gmra.mrb[0].mxu0 %v780
          %v851 = vpop.f32.mrb[0].mxu0
          %v852 = vadd.f32 %v777, %v851
          %v853 = vpop.f32.mrb[0].mxu0
          %854 = vmatprep.mubr.f32.mxu0 0.0
          %855 = vmatmul.mubr.f32.gmra.mrb[0].mxu0 %v783
          %v856 = vpop.f32.mrb[0].mxu0
          %v857 = vadd.f32 %v777, %v856
          %v858 = vpop.f32.mrb[0].mxu0
          %859 = vdwg.mxu0
          %v860 = vxor.u32 %v852, 2147483648
          %v861 = vxor.u32 %v857, 2147483648
          %v862 = vmul.f32 %v860, 1.442695
          %v863 = vpow.pop %v862
          %v864 = vmul.f32 %v861, 1.442695
          %v865 = vpow.pop %v864
          %v866 = vadd.f32 %v863, 1.0
          %v867 = vadd.f32 %v865, 1.0
          %v868 = vrcp.pop %v866
          %v869 = vmul.f32 1.0, %v868
          %v870 = vrcp.pop %v867
          %v871 = vmul.f32 1.0, %v870
          %v872 = vmul.f32 %v852, %v869
          %v873 = vmul.f32 %v857, %v871
          %v874 = vld [vmem:[%s8] sm:$0xff]
          %v875 = vld [vmem:[%s8 + $0x8] sm:$0xff]
          %v876 = vld [vmem:[%s8 + $0x10] sm:$0xff]
          %v877 = vld [vmem:[%s8 + $0x18] sm:$0xff]
          %v879 = vsel %vm578, %v872, 0
          %v882 = vsel %vm578, %v873, 0
          %884 = vmatprep.subr.mxu0 0.0
          %885 = vmatpush1.msra.mxu0 %v874
          %886 = vmatprep.subr.mxu0 0.0
          %887 = vmatpush1.msra.mxu0 %v875
          %888 = vmatprep.subr.mxu0 0.0
          %889 = vmatpush1.msra.mxu0 %v876
          %890 = vmatprep.subr.mxu0 0.0
          %891 = vmatpush1.msra.mxu0 %v877
          %892 = vmatprep.subr.mxu0 0.0
          %893 = vmatpush1.msra.mxu0 0.0
          %894 = vmatprep.subr.mxu0 0.0
          %895 = vmatpush1.msra.mxu0 0.0
          %896 = vmatprep.subr.mxu0 0.0
          %897 = vmatpush1.msra.mxu0 0.0
          %898 = vmatprep.subr.mxu0 0.0
          %899 = vmatpush1.msra.mxu0 0.0
          %900 = vmatprep.subr.mxu0 0.0
          %901 = vmatpush1.msra.mxu0 0.0
          %902 = vmatprep.subr.mxu0 0.0
          %903 = vmatpush1.msra.mxu0 0.0
          %904 = vmatprep.subr.mxu0 0.0
          %905 = vmatpush1.msra.mxu0 0.0
          %906 = vmatprep.subr.mxu0 0.0
          %907 = vmatpush1.msra.mxu0 0.0
          %908 = vmatprep.subr.mxu0 0.0
          %909 = vmatpush1.msra.mxu0 0.0
          %910 = vmatprep.subr.mxu0 0.0
          %911 = vmatpush1.msra.mxu0 0.0
          %912 = vmatprep.subr.mxu0 0.0
          %913 = vmatpush1.msra.mxu0 0.0
          %914 = vmatprep.subr.mxu0 0.0
          %915 = vmatpush1.msra.mxu0 0.0
          %916 = vmatprep.subr.mxu0 0.0
          %917 = vmatpush1.msra.mxu0 0.0
          %918 = vmatprep.subr.mxu0 0.0
          %919 = vmatpush1.msra.mxu0 0.0
          %920 = vmatprep.subr.mxu0 0.0
          %921 = vmatpush1.msra.mxu0 0.0
          %922 = vmatprep.subr.mxu0 0.0
          %923 = vmatpush1.msra.mxu0 0.0
          %924 = vmatprep.subr.mxu0 0.0
          %925 = vmatpush1.msra.mxu0 0.0
          %926 = vmatprep.subr.mxu0 0.0
          %927 = vmatpush1.msra.mxu0 0.0
          %928 = vmatprep.subr.mxu0 0.0
          %929 = vmatpush1.msra.mxu0 0.0
          %930 = vmatprep.subr.mxu0 0.0
          %931 = vmatpush1.msra.mxu0 0.0
          %932 = vmatprep.subr.mxu0 0.0
          %933 = vmatpush1.msra.mxu0 0.0
          %934 = vmatprep.subr.mxu0 0.0
          %935 = vmatpush1.msra.mxu0 0.0
          %936 = vmatprep.subr.mxu0 0.0
          %937 = vmatpush1.msra.mxu0 0.0
          %938 = vmatprep.subr.mxu0 0.0
          %939 = vmatpush1.msra.mxu0 0.0
          %940 = vmatprep.subr.mxu0 0.0
          %941 = vmatpush1.msra.mxu0 0.0
          %942 = vmatprep.subr.mxu0 0.0
          %943 = vmatpush1.msra.mxu0 0.0
          %944 = vmatprep.subr.mxu0 0.0
          %945 = vmatpush1.msra.mxu0 0.0
          %946 = vmatprep.subr.mxu0 0.0
          %947 = vmatpush1.msra.mxu0 0.0
          %948 = vmatprep.mubr.f32.mxu0 0.0
          %949 = vmatmul.mubr.f32.gmra.mrb[0].mxu0 %v879
          %v950 = vpop.f32.mrb[0].mxu0
          %v951 = vadd.f32 0.0, %v950
          %v952 = vpop.f32.mrb[0].mxu0
          %953 = vmatprep.mubr.f32.mxu0 0.0
          %954 = vmatmul.mubr.f32.gmra.mrb[0].mxu0 %v882
          %v955 = vpop.f32.mrb[0].mxu0
          %v956 = vadd.f32 0.0, %v955
          %v957 = vpop.f32.mrb[0].mxu0
          %958 = vdwg.mxu0
          %959 = vst [vmem:[%s387] sm:$0xff] %v951
          %960 = vst [vmem:[%s387 + $0x8] sm:$0xff] %v956
        $region60: #{tpu_custom_call.1} parent=47 // pred_fallthru
          _
        %s961 = sand.u32 %s242, 1
        %s962 = scalar_lea.sflag [#allocation7], %s961
        %s963 = sand.u32 %s242, 1
        %s964 = smul.addr %s963, 16
        %s965 = scalar_lea.vmem [#allocation6], %s964
        // Predicated region
        $region61: #{tpu_custom_call.1} parent=47 // pred_check
          %p966 = pneg %p252
        $region62: #{tpu_custom_call.1} parent=47 // pred_check_branch
          %968 = sbr.rel (%p966) target = $region64
        $region63: #{tpu_custom_call.1} parent=47 // pred_region
          %s969 = smul.u32 2, %s37
          %s971 = ssub.s32 256, 256
          %972 = vsyncadd %s962, %s971
          %s973 = smul.addr %s969, 128
          %s974 = scalar_lea.hbm %s9, %s973
          %s975 = sshll.u32 %s965, 4
          %s976 = int_to_ptr.vmem [resolvable:$true] %s975
          %981 = dma.vmem_to_hbm [thread:$0]  %s976, 256, %s974, %s962, 128, 128, 8
        $region64: #{tpu_custom_call.1} parent=47 // pred_fallthru
          _
      $region48: #{tpu_custom_call.1} parent=5 // pred_fallthru
        _
      %p982 = scmp.le.s32.totalorder 2, %s28
      // Predicated region
      $region65: #{tpu_custom_call.1} parent=5 // pred_check
        %p983 = pneg %p982
      $region66: #{tpu_custom_call.1} parent=5 // pred_check_branch
        %985 = sbr.rel (%p983) target = $region68
      $region67: #{tpu_custom_call.1} parent=5 // pred_region
        %s986 = ssub.s32 %s28, 2
        // Predicated region
        $region69: #{tpu_custom_call.1} parent=67 // pred_check
          %p987 = pneg %p258
        $region70: #{tpu_custom_call.1} parent=67 // pred_check_branch
          %989 = sbr.rel (%p987) target = $region72
        $region71: #{tpu_custom_call.1} parent=67 // pred_region
          %s990 = sand.u32 %s243, 1
          %s991 = scalar_lea.sflag [#allocation7], %s990
          %s992 = sand.u32 %s243, 1
          %s993 = smul.addr %s992, 16
          %s994 = scalar_lea.vmem [#allocation6], %s993
          %995 = dma.done %s991, 256
        $region72: #{tpu_custom_call.1} parent=67 // pred_fallthru
          _
      $region68: #{tpu_custom_call.1} parent=5 // pred_fallthru
        _
    $region6: #{tpu_custom_call.1} parent=1 // loop_footer
      %s32 = sadd.s32 1, %s28
    $region7: #{tpu_custom_call.1} parent=1 // loop_footer_branch
      %27 = sbr.rel target = $region3
    $region8: #{tpu_custom_call.1} parent=1 // loop_exit
      _
    %996 = vsyncpa [#allocation7], 1
    %s997 = scalar_lea.sflag [#allocation7], 1
    %998 = vsyncpa %s997, 1

</llo_original>
